<compile_context>
chip_gen: v6e
topology: v6e:2x2x1
jax: 0.10.0
libtpu: 0.0.40
codegen_flags: <defaults>
</compile_context>

<pallas_src>
import functools

import jax
import jax.numpy as jnp
from jax import lax
from jax.experimental import pallas as pl
from jax.experimental.pallas import tpu as pltpu


# ----------------------------------------------------------------------------
# Kernel: one (batch b, column-tile j) step of  softmax(f @ g^T, axis=0)
# ----------------------------------------------------------------------------
def _attention_softmax_kernel(f_ref, g_ref, out_ref, *, use_bf16_exp):
    """f_ref  : (1, N,  C8) bf16 — all spatial rows, already projected (f branch)
    g_ref  : (1, TN, C8) bf16 — projected rows j*TN .. j*TN+TN (g branch)
    out_ref: (1, N,  TN)      — softmax(att, dim=1) column tile (bf16 store)
    """
    f = f_ref[0]                                                     # (N,  C8)
    g = g_ref[0]                                                     # (TN, C8)

    # s[i, j] = f[i] . g[j] — contract on C8 directly (no transpose), f32 acc.
    s = lax.dot_general(f, g, (((1,), (1,)), ((), ())),
                        preferred_element_type=jnp.float32)          # (N, TN)

    # PyTorch softmax(att, dim=1) == softmax over the row axis, per column.
    m = jnp.max(s, axis=0, keepdims=True)                            # (1, TN)
    z = s - m
    if use_bf16_exp:
        # v6e/v7x EUP supports bf16 at ~2x throughput; math back to f32 after.
        e = jnp.exp(z.astype(jnp.bfloat16)).astype(jnp.float32)
    else:
        # v5e (and older) has no bf16 EUP path: keep the exp in f32.
        e = jnp.exp(z)
    inv = pl.reciprocal(jnp.sum(e, axis=0, keepdims=True), approx=True)  # (1, TN)
    out_ref[0] = (e * inv).astype(out_ref.dtype)


# ----------------------------------------------------------------------------
# Wrapper helpers
# ----------------------------------------------------------------------------
def _fold_bn(conv_w, conv_b, gamma, beta, mean, var, eps=1e-5):
    """Fold eval-mode BatchNorm into a 1x1 conv.

    conv_w: (C8, C)  conv_b: (C8,)  BN params: (C8,)
    Returns W_folded: (C, C8), b_folded: (1, C8) ready for x @ W + b.
    """
    scale = gamma / jnp.sqrt(var + eps)                 # (C8,)
    w_f = (conv_w * scale[:, None]).T                   # (C, C8)
    b_f = ((conv_b - mean) * scale + beta)[None, :]     # (1, C8)
    return w_f, b_f


def _tpu_vmem_capacity_bytes():
    """Per-TensorCore VMEM capacity; generation-aware with conservative fallback."""
    try:
        cap = int(getattr(pltpu.get_tpu_info(), "vmem_capacity_bytes", 0) or 0)
        if cap > 0:
            return cap
    except Exception:
        pass
    kind = ""
    try:
        kind = jax.devices()[0].device_kind.lower()
    except Exception:
        pass
    if "v5" in kind or "v6" in kind:
        return 128 << 20                  # v5e / v6e
    return 64 << 20                       # conservative (v7x per-TC / unknown)


def _use_bf16_exp():
    """bf16 exp only on parts whose EUP supports bf16 (v6e / v7x)."""
    try:
        kind = jax.devices()[0].device_kind.lower()
    except Exception:
        return True
    return not any(v in kind for v in ("v2", "v3", "v4", "v5"))


def _vmem_estimate(N, C8, tn, out_itemsize):
    """Rough per-step VMEM footprint (bytes), inputs/outputs double-buffered."""
    bf16, f32 = 2, 4
    f_blk = 2 * N * C8 * bf16                     # (1, N, C8) f tile
    g_blk = 2 * tn * C8 * bf16                    # (1, tn, C8) g tile
    out_blk = 2 * N * tn * out_itemsize           # (1, N, tn) output tile
    interm = 3 * N * tn * f32 + 4 * tn * f32      # s, e, e*inv tmp; m/sum/inv
    return f_blk + g_blk + out_blk + interm


def _pick_tile(N_pad, N, C8, out_itemsize, budget_bytes):
    for tn in (1024, 768, 512, 384, 256, 128):
        if (tn <= N_pad and N_pad % tn == 0
                and _vmem_estimate(N, C8, tn, out_itemsize) <= budget_bytes):
            return tn
    return 128


# ----------------------------------------------------------------------------
# Public entry point
# ----------------------------------------------------------------------------
def self_attention(x_nchw, params, *, tn=None, out_dtype=jnp.bfloat16):
    """x_nchw: (B, C, H, W) float32. Returns softmax attention (B, N, N)."""
    B, C, H, W = x_nchw.shape
    C8 = C // 8
    N = H * W
    N_pad = ((N + 127) // 128) * 128          # lane-dense column axis

    out_itemsize = jnp.dtype(out_dtype).itemsize
    cap = _tpu_vmem_capacity_bytes()
    if tn is None:
        tn = _pick_tile(N_pad, N, C8, out_itemsize,
                        budget_bytes=int(0.7 * cap))
    assert tn % 128 == 0 and N_pad % tn == 0, (tn, N_pad)

    # BN folding. The f-branch bias is dropped: it adds bf.g[j] to every row of
    # column j, which is constant along softmax dim=1 and cancels exactly.
    wf, _bf_unused = _fold_bn(params["f_w"], params["f_b"],
                              params["f_gamma"], params["f_beta"],
                              params["f_mean"], params["f_var"])
    wg, bg = _fold_bn(params["g_w"], params["g_b"],
                      params["g_gamma"], params["g_beta"],
                      params["g_mean"], params["g_var"])

    # Hoist the 1x1-conv+BN projections into XLA (computed once per batch):
    # the kernel then streams (N, C8) / (N_pad, C8) instead of (N, C).
    x_cl = jnp.transpose(x_nchw, (0, 2, 3, 1)).reshape(B, N, C).astype(jnp.bfloat16)
    f = jnp.einsum("bnc,ck->bnk", x_cl, wf.astype(jnp.bfloat16),
                   preferred_element_type=jnp.float32)                  # (B, N, C8)
    g = jnp.einsum("bnc,ck->bnk", x_cl, wg.astype(jnp.bfloat16),
                   preferred_element_type=jnp.float32) + bg.astype(jnp.float32)
    f = f.astype(jnp.bfloat16)
    # Pad only the small projected g on its row axis; padded (zero) rows just
    # produce throwaway output columns (stripped below), never NaN/Inf.
    g = jnp.pad(g, ((0, 0), (0, N_pad - N), (0, 0))).astype(jnp.bfloat16)

    vmem_limit = int(min(max(2 * _vmem_estimate(N, C8, tn, out_itemsize),
                             32 << 20),
                         int(0.75 * cap)))

    kernel = functools.partial(_attention_softmax_kernel,
                               use_bf16_exp=_use_bf16_exp())

    out = pl.pallas_call(
        kernel,
        out_shape=jax.ShapeDtypeStruct((B, N, N_pad), out_dtype),
        grid_spec=pltpu.PrefetchScalarGridSpec(
            num_scalar_prefetch=0,
            grid=(B, N_pad // tn),
            in_specs=[
                pl.BlockSpec((1, N, C8), lambda b, j: (b, 0, 0)),    # projected f
                pl.BlockSpec((1, tn, C8), lambda b, j: (b, j, 0)),   # projected g tile
            ],
            out_specs=pl.BlockSpec((1, N, tn), lambda b, j: (b, 0, j)),
        ),
        compiler_params=pltpu.CompilerParams(
            dimension_semantics=("parallel", "parallel"),
            vmem_limit_bytes=vmem_limit),
    )(f, g)

    return out[:, :, :N]


# ----------------------------------------------------------------------------
# Params / reference
# ----------------------------------------------------------------------------
def init_params(key, C):
    C8 = C // 8
    ks = jax.random.split(key, 10)
    return {
        # Conv2d(C, C//8, 1): weight (C8, C, 1, 1) stored squeezed as (C8, C)
        "f_w": 0.1 * jax.random.normal(ks[0], (C8, C), jnp.float32),
        "f_b": 0.05 * jax.random.normal(ks[1], (C8,), jnp.float32),
        "g_w": 0.1 * jax.random.normal(ks[2], (C8, C), jnp.float32),
        "g_b": 0.05 * jax.random.normal(ks[3], (C8,), jnp.float32),
        # BatchNorm2d(C//8) inference-mode statistics / affine params
        "f_gamma": 1.0 + 0.1 * jax.random.normal(ks[4], (C8,), jnp.float32),
        "f_beta": 0.05 * jax.random.normal(ks[5], (C8,), jnp.float32),
        "f_mean": 0.02 * jax.random.normal(ks[6], (C8,), jnp.float32),
        "f_var": 0.5 + jax.random.uniform(ks[7], (C8,), jnp.float32),
        "g_gamma": 1.0 + 0.1 * jax.random.normal(ks[8], (C8,), jnp.float32),
        "g_beta": 0.05 * jax.random.normal(ks[9], (C8,), jnp.float32),
        "g_mean": jnp.zeros((C8,), jnp.float32),
        "g_var": jnp.ones((C8,), jnp.float32),
    }


def _reference(x_nchw, params):
    """Pure-JAX f32 reference mirroring the PyTorch forward (eval-mode BN)."""
    B, C, H, W = x_nchw.shape
    C8 = C // 8
    N = H * W
    eps = 1e-5

    def conv_bn(w, b, gamma, beta, mean, var):
        y = jnp.einsum("bchw,oc->bohw", x_nchw, w) + b[None, :, None, None]
        return (y - mean[None, :, None, None]) / jnp.sqrt(var + eps)[None, :, None, None] \
               * gamma[None, :, None, None] + beta[None, :, None, None]

    f = conv_bn(params["f_w"], params["f_b"], params["f_gamma"],
                params["f_beta"], params["f_mean"], params["f_var"])
    g = conv_bn(params["g_w"], params["g_b"], params["g_gamma"],
                params["g_beta"], params["g_mean"], params["g_var"])
    f = jnp.transpose(f.reshape(B, C8, N), (0, 2, 1))   # (B, N, C8)
    g = g.reshape(B, C8, N)                             # (B, C8, N)
    att = jnp.einsum("bnc,bcm->bnm", f, g)              # (B, N, N)
    return jax.nn.softmax(att, axis=1)                  # softmax over dim=1


# TODO(synk): training-mode BatchNorm (batch statistics + running-stat update)
# is not implemented; the kernel folds eval-mode running stats into the convs.

if __name__ == "__main__":
    key = jax.random.PRNGKey(0)

    # (B, C, H, W, forced column tile).  Second config exercises column padding
    # (N=144 -> 256) and two column tiles (tn=128).
    configs = [
        (2, 32, 8, 8, None),
        (2, 32, 12, 12, 128),
    ]

    for (B, C, H, W, tn_force) in configs:
        key, kx, kp = jax.random.split(key, 3)
        x = jax.random.normal(kx, (B, C, H, W), jnp.float32)
        params = init_params(kp, C)

        out = jax.block_until_ready(self_attention(x, params, tn=tn_force))
        ref = _reference(x, params)

        assert out.shape == (B, H * W, H * W), out.shape
        out_f32 = out.astype(jnp.float32)
        max_err = jnp.max(jnp.abs(out_f32 - ref))
        # bf16 MXU inputs, bf16 store, bf16 exp (v6e/v7x), approx reciprocal
        assert jnp.allclose(out_f32, ref, rtol=2e-2, atol=2e-2), \
            f"max abs err {max_err}"
        # columns (dim=1) of the softmax must sum to ~1
        assert jnp.allclose(jnp.sum(out_f32, axis=1), 1.0, atol=2e-2)

    print("KERNEL_OK")
</pallas_src>

<mosaic_0001>
module attributes {stable_mosaic.version = 11 : i64} {
  func.func @_attention_softmax_kernel(%arg0: i32, %arg1: i32, %arg2: memref<1x64x4xbf16, #tpu.memory_space<vmem>>, %arg3: memref<1x128x4xbf16, #tpu.memory_space<vmem>>, %arg4: memref<1x64x128xbf16, #tpu.memory_space<vmem>>) attributes {dimension_semantics = [#tpu.dimension_semantics<parallel>, #tpu.dimension_semantics<parallel>], iteration_bounds = array<i64: 2, 1>, scalar_prefetch = 0 : i64, scratch_operands = 0 : i64, tpu.core_type = #tpu.core_type<tc>, window_params = [{transform_indices = @transform_0, window_bounds = array<i64: 1, 64, 4>}, {transform_indices = @transform_1, window_bounds = array<i64: 1, 128, 4>}, {transform_indices = @transform_2, window_bounds = array<i64: 1, 64, 128>}]} {
    %c0 = arith.constant 0 : index
    %c0_0 = arith.constant 0 : index
    %c0_1 = arith.constant 0 : index
    %0 = vector.load %arg2[%c0, %c0_0, %c0_1] : memref<1x64x4xbf16, #tpu.memory_space<vmem>>, vector<1x64x4xbf16>
    %1 = vector.shape_cast %0 : vector<1x64x4xbf16> to vector<64x4xbf16>
    %c0_2 = arith.constant 0 : index
    %c0_3 = arith.constant 0 : index
    %c0_4 = arith.constant 0 : index
    %2 = vector.load %arg3[%c0_2, %c0_3, %c0_4] : memref<1x128x4xbf16, #tpu.memory_space<vmem>>, vector<1x128x4xbf16>
    %3 = vector.shape_cast %2 : vector<1x128x4xbf16> to vector<128x4xbf16>
    %cst = arith.constant dense<0.000000e+00> : vector<64x128xf32>
    %4 = tpu.matmul %1, %3, %cst {dimension_numbers = #tpu.dot_dimension_numbers<[1], [1], [0], [0], [0, 0, 1, 0], [], []>} : vector<64x4xbf16>, vector<128x4xbf16>, vector<64x128xf32> -> vector<64x128xf32>
    %cst_5 = arith.constant dense<0xFF800000> : vector<128xf32>
    %5 = vector.multi_reduction <maximumf>, %4, %cst_5 [0] : vector<64x128xf32> to vector<128xf32>
    %6 = vector.shape_cast %5 : vector<128xf32> to vector<1x128xf32>
    %7 = vector.broadcast %6 : vector<1x128xf32> to vector<64x128xf32>
    %8 = arith.subf %4, %7 : vector<64x128xf32>
    %9 = arith.truncf %8 : vector<64x128xf32> to vector<64x128xbf16>
    %10 = math.exp %9 : vector<64x128xbf16>
    %11 = arith.extf %10 : vector<64x128xbf16> to vector<64x128xf32>
    %cst_6 = arith.constant dense<0.000000e+00> : vector<128xf32>
    %12 = vector.multi_reduction <add>, %11, %cst_6 [0] : vector<64x128xf32> to vector<128xf32>
    %13 = vector.shape_cast %12 : vector<128xf32> to vector<1x128xf32>
    %14 = tpu.reciprocal %13 {approx = true} : vector<1x128xf32> -> vector<1x128xf32>
    %15 = vector.broadcast %14 : vector<1x128xf32> to vector<64x128xf32>
    %16 = arith.mulf %11, %15 : vector<64x128xf32>
    %17 = arith.truncf %16 : vector<64x128xf32> to vector<64x128xbf16>
    %c0_7 = arith.constant 0 : index
    %c0_8 = arith.constant 0 : index
    %c0_9 = arith.constant 0 : index
    %18 = vector.load %arg4[%c0_7, %c0_8, %c0_9] : memref<1x64x128xbf16, #tpu.memory_space<vmem>>, vector<1x64x128xbf16>
    %19 = vector.shape_cast %18 : vector<1x64x128xbf16> to vector<64x128xbf16>
    %20 = vector.shape_cast %17 : vector<64x128xbf16> to vector<1x64x128xbf16>
    tpu.vector_store %arg4[%c0_7, %c0_8, %c0_9], %20 {strides = array<i32>} : memref<1x64x128xbf16, #tpu.memory_space<vmem>>, vector<1x64x128xbf16>,
    return
  }
  func.func @transform_0(%arg0: i32, %arg1: i32) -> (i32, i32, i32) {
    %c0_i32 = arith.constant 0 : i32
    %c0_i32_0 = arith.constant 0 : i32
    %c0_i32_1 = arith.constant 0 : i32
    return %arg0, %c0_i32, %c0_i32_0 : i32, i32, i32
  }
  func.func @transform_1(%arg0: i32, %arg1: i32) -> (i32, i32, i32) {
    %c0_i32 = arith.constant 0 : i32
    %c0_i32_0 = arith.constant 0 : i32
    return %arg0, %arg1, %c0_i32 : i32, i32, i32
  }
  func.func @transform_2(%arg0: i32, %arg1: i32) -> (i32, i32, i32) {
    %c0_i32 = arith.constant 0 : i32
    %c0_i32_0 = arith.constant 0 : i32
    return %arg0, %c0_i32, %arg1 : i32, i32, i32
  }
}

</mosaic_0001>

<llo_original>
// kernel: tpu_custom_call.1
$region0: #{tpu_custom_call.1}
  #allocation0 [shape = 'u32[]', space=smem, size = 0x4, offset = 0x4, fixed_abs, tag = 'smem constant byte address 0x4 - core index']
  #allocation1 [shape = 'u32[144,128]{1,0:T(1,128)}', space=vmem, size = 0x12000, scoped, tag = 'internal scratch']
  %s0 = inlined_call_operand.vmem [shape: bf16[2,64,4], index: 0, kind: input, shape index: {}]
  %s1 = inlined_call_operand.vmem [shape: bf16[2,128,4], index: 1, kind: input, shape index: {}]
  %s2 = inlined_call_operand.hbm [shape: bf16[2,64,128], index: 2, kind: output, shape index: {}]
  %s3 = sld [smem:[#allocation0]]
  $region41: #{tpu_custom_call.1} parent=0
    _
  %s5 = ssub.s32 1, %s3
  %s6 = scalar_select 0, %s5, %s3
  $region1: #{tpu_custom_call.1} parent=0
    #allocation2 [shape = 'u8[32768]{0}', space=vmem, size = 0x8000, scoped, tag = 'output window, operand 0']
    #allocation3 [shape = 's32[2]{0}', space=sflag, size = 0x8, scoped, tag = 'scoped memory for tpu_custom_call.1']
    %7 = vsyncpa [#allocation3], 0
    %s8 = scalar_lea.sflag [#allocation3], 1
    %9 = vsyncpa %s8, 0
    loop: start=0, step=1, limit=4
    $region2: #{tpu_custom_call.1} parent=1 // loop_pre_header
      _
    $region3: #{tpu_custom_call.1} parent=1 // loop_header
      %s11 = sphi 0, %s15
      %p12 = scmp.ge.s32.totalorder %s11, 4
      %s18 = sphi 0, %s30
      %s19 = sphi 0, %s26
      %s20 = sphi 0, %s18
      %s21 = sphi 0, %s19
      %s22 = sphi 0, %s20
      %s23 = sphi 0, %s21
      %s33 = sphi 0, %s35
      %s36 = sphi 0, %s33
      %s37 = sphi 0, %s36
      %s53 = sphi 0, %s37
      %s61 = sphi 0, %s63
      %s64 = sphi 0, %s61
      %s65 = sphi 0, %s64
      %s81 = sphi 0, %s65
      %s89 = sphi 0, %s91
      %s92 = sphi 0, %s89
      %s93 = sphi 0, %s92
      %s109 = sphi 0, %s93
    $region4: #{tpu_custom_call.1} parent=1 // loop_header_branch
      %14 = sbr.rel (%p12) target = $region8
    $region5: #{tpu_custom_call.1} parent=1 // loop_body
      %s16 = ssub.s32 %s11, 1
      %s17 = ssub.s32 %s11, 2
      %s24 = sadd.s32 1, %s19
      %p25 = scmp.ge.s32.totalorder %s24, 1
      %s26 = scalar_select %p25, 0, %s24
      %s27 = sadd.s32 1, %s18
      %s28 = scalar_select %p25, %s27, %s18
      %p29 = scmp.ge.s32.totalorder %s28, 2
      %s30 = scalar_select %p29, 0, %s28
      %s31 = ssub.s32 %s18, %s30
      %p32 = scmp.eq.s32.totalorder %s31, 0
      %s34 = sadd.s32 %s33, 1
      %s35 = scalar_select %p32, %s33, %s34
      %p38 = pneg %p32
      %p39 = scmp.eq.s32.totalorder %s11, 1
      %p40 = por %p38, %p39
      %p41 = scmp.ne.s32.totalorder %s33, %s36
      %p42 = scmp.eq.s32.totalorder %s11, 0
      %p43 = por %p41, %p42
      %p44 = scmp.ne.s32.totalorder %s33, %s36
      %p45 = scmp.eq.s32.totalorder %s16, 1
      %p46 = por %p44, %p45
      %p47 = scmp.ne.s32.totalorder %s36, %s37
      %p48 = scmp.eq.s32.totalorder %s16, 0
      %p49 = por %p47, %p48
      %p50 = scmp.ne.s32.totalorder %s36, %s37
      %p51 = scmp.eq.s32.totalorder %s17, 1
      %p52 = por %p50, %p51
      %p54 = scmp.ne.s32.totalorder %s37, %s53
      %p55 = scmp.eq.s32.totalorder %s17, 0
      %p56 = por %p54, %p55
      %s57 = ssub.s32 %s18, %s30
      %s58 = ssub.s32 %s19, %s26
      %s59 = sor.u32 %s57, %s58
      %p60 = scmp.eq.s32.totalorder %s59, 0
      %s62 = sadd.s32 %s61, 1
      %s63 = scalar_select %p60, %s61, %s62
      %p66 = pneg %p60
      %p67 = scmp.eq.s32.totalorder %s11, 1
      %p68 = por %p66, %p67
      %p69 = scmp.ne.s32.totalorder %s61, %s64
      %p70 = scmp.eq.s32.totalorder %s11, 0
      %p71 = por %p69, %p70
      %p72 = scmp.ne.s32.totalorder %s61, %s64
      %p73 = scmp.eq.s32.totalorder %s16, 1
      %p74 = por %p72, %p73
      %p75 = scmp.ne.s32.totalorder %s64, %s65
      %p76 = scmp.eq.s32.totalorder %s16, 0
      %p77 = por %p75, %p76
      %p78 = scmp.ne.s32.totalorder %s64, %s65
      %p79 = scmp.eq.s32.totalorder %s17, 1
      %p80 = por %p78, %p79
      %p82 = scmp.ne.s32.totalorder %s65, %s81
      %p83 = scmp.eq.s32.totalorder %s17, 0
      %p84 = por %p82, %p83
      %s85 = ssub.s32 %s18, %s30
      %s86 = ssub.s32 %s19, %s26
      %s87 = sor.u32 %s85, %s86
      %p88 = scmp.eq.s32.totalorder %s87, 0
      %s90 = sadd.s32 %s89, 1
      %s91 = scalar_select %p88, %s89, %s90
      %p94 = pneg %p88
      %p95 = scmp.eq.s32.totalorder %s11, 1
      %p96 = por %p94, %p95
      %p97 = scmp.ne.s32.totalorder %s89, %s92
      %p98 = scmp.eq.s32.totalorder %s11, 0
      %p99 = por %p97, %p98
      %p100 = scmp.ne.s32.totalorder %s89, %s92
      %p101 = scmp.eq.s32.totalorder %s16, 1
      %p102 = por %p100, %p101
      %p103 = scmp.ne.s32.totalorder %s92, %s93
      %p104 = scmp.eq.s32.totalorder %s16, 0
      %p105 = por %p103, %p104
      %p106 = scmp.ne.s32.totalorder %s92, %s93
      %p107 = scmp.eq.s32.totalorder %s17, 1
      %p108 = por %p106, %p107
      %p110 = scmp.ne.s32.totalorder %s93, %s109
      %p111 = scmp.eq.s32.totalorder %s17, 0
      %p112 = por %p110, %p111
      %p113 = scmp.le.s32.totalorder 1, %s11
      %p114 = scmp.lt.s32.totalorder %s11, 3
      %p115 = pnand %p113, %p114
      %p116 = pneg %p115
      // Predicated region
      $region9: #{tpu_custom_call.1} parent=5 // pred_check
        _
      $region10: #{tpu_custom_call.1} parent=5 // pred_check_branch
        %118 = sbr.rel (%p115) target = $region12
      $region11: #{tpu_custom_call.1} parent=5 // pred_region
        %s119 = ssub.s32 %s11, 1
      $region12: #{tpu_custom_call.1} parent=5 // pred_fallthru
        _
      %p120 = scmp.lt.s32.totalorder %s11, 2
      // Predicated region
      $region13: #{tpu_custom_call.1} parent=5 // pred_check
        %p121 = pneg %p120
      $region14: #{tpu_custom_call.1} parent=5 // pred_check_branch
        %123 = sbr.rel (%p121) target = $region16
      $region15: #{tpu_custom_call.1} parent=5 // pred_region
        // Predicated region
        $region17: #{tpu_custom_call.1} parent=15 // pred_check
          %p124 = pneg %p43
        $region18: #{tpu_custom_call.1} parent=15 // pred_check_branch
          %126 = sbr.rel (%p124) target = $region20
        $region19: #{tpu_custom_call.1} parent=15 // pred_region
          %p127 = scmp.lt.s32.totalorder %s18, 1
          %s128 = scalar_select %p127, %s18, 1
          %s129 = smul.addr %s128, 8
          %s130 = smul.addr %s129, 4
          %s131 = scalar_lea.vmem %s0, %s130
        $region20: #{tpu_custom_call.1} parent=15 // pred_fallthru
          _
        // Predicated region
        $region21: #{tpu_custom_call.1} parent=15 // pred_check
          %p132 = pneg %p71
        $region22: #{tpu_custom_call.1} parent=15 // pred_check_branch
          %134 = sbr.rel (%p132) target = $region24
        $region23: #{tpu_custom_call.1} parent=15 // pred_region
          %s135 = smul.u32 16, %s19
          %p136 = scmp.lt.s32.totalorder %s18, 1
          %s137 = scalar_select %p136, %s18, 1
          %p138 = scmp.lt.s32.totalorder %s135, 15
          %s139 = scalar_select %p138, %s135, 15
          %s140 = smul.addr %s137, 16
          %s141 = sadd.s32 %s139, %s140
          %s142 = smul.addr %s141, 4
          %s143 = scalar_lea.vmem %s1, %s142
          %s144 = smul.u32 16, %s19
        $region24: #{tpu_custom_call.1} parent=15 // pred_fallthru
          _
      $region16: #{tpu_custom_call.1} parent=5 // pred_fallthru
        _
      %p145 = scmp.le.s32.totalorder 1, %s11
      %p146 = scmp.lt.s32.totalorder %s11, 3
      %p147 = pnand %p145, %p146
      %p148 = pneg %p147
      // Predicated region
      $region25: #{tpu_custom_call.1} parent=5 // pred_check
        _
      $region26: #{tpu_custom_call.1} parent=5 // pred_check_branch
        %150 = sbr.rel (%p147) target = $region28
      $region27: #{tpu_custom_call.1} parent=5 // pred_region
        %s151 = ssub.s32 %s11, 1
        %p152 = scmp.lt.s32.totalorder %s20, 1
        %s153 = scalar_select %p152, %s20, 1
        %s154 = smul.addr %s153, 8
        %s155 = smul.addr %s154, 4
        %s156 = scalar_lea.vmem %s0, %s155
        %p157 = pneg %p49
        %p158 = pneg %p46
        %s159 = smul.u32 16, %s21
        %p160 = scmp.lt.s32.totalorder %s20, 1
        %s161 = scalar_select %p160, %s20, 1
        %p162 = scmp.lt.s32.totalorder %s159, 15
        %s163 = scalar_select %p162, %s159, 15
        %s164 = smul.addr %s161, 16
        %s165 = sadd.s32 %s163, %s164
        %s166 = smul.addr %s165, 4
        %s167 = scalar_lea.vmem %s1, %s166
        %p168 = pneg %p77
        %p169 = pneg %p74
        %p170 = pneg %p105
        %p171 = pneg %p102
        %s172 = sand.u32 %s92, 1
        %s173 = scalar_lea.sflag [#allocation3], %s172
        %s174 = sand.u32 %s92, 1
        %s175 = smul.addr %s174, 32
        %s176 = scalar_lea.vmem [#allocation2], %s175
        %p177 = scmp.lt.s32.totalorder %s20, 1
        %s178 = scalar_select %p177, %s20, 1
        %s179 = smul.addr %s178, 8
        %s180 = smul.addr %s179, 4
        %s181 = scalar_lea.vmem %s0, %s180
        %s182 = smul.u32 16, %s21
        %p183 = scmp.lt.s32.totalorder %s20, 1
        %s184 = scalar_select %p183, %s20, 1
        %p185 = scmp.lt.s32.totalorder %s182, 15
        %s186 = scalar_select %p185, %s182, 15
        %s187 = smul.addr %s184, 16
        %s188 = sadd.s32 %s186, %s187
        %s189 = smul.addr %s188, 4
        %s190 = scalar_lea.vmem %s1, %s189
        %s191 = smul.u32 16, %s21
        %v193 = vld [vmem:[%s181] sm:$0xf]
        %v194 = vld [vmem:[%s181 + $0x4] sm:$0xf]
        %v195 = vld [vmem:[%s181 + $0x8] sm:$0xf]
        %v196 = vld [vmem:[%s181 + $0xc] sm:$0xf]
        %v197 = vld [vmem:[%s181 + $0x10] sm:$0xf]
        %v198 = vld [vmem:[%s181 + $0x14] sm:$0xf]
        %v199 = vld [vmem:[%s181 + $0x18] sm:$0xf]
        %v200 = vld [vmem:[%s181 + $0x1c] sm:$0xf]
        %v201 = vld [vmem:[%s190] sm:$0xf]
        %v202 = vld [vmem:[%s190 + $0x4] sm:$0xf]
        %v203 = vld [vmem:[%s190 + $0x8] sm:$0xf]
        %v204 = vld [vmem:[%s190 + $0xc] sm:$0xf]
        %v205 = vld [vmem:[%s190 + $0x10] sm:$0xf]
        %v206 = vld [vmem:[%s190 + $0x14] sm:$0xf]
        %v207 = vld [vmem:[%s190 + $0x18] sm:$0xf]
        %v208 = vld [vmem:[%s190 + $0x1c] sm:$0xf]
        %v209 = vld [vmem:[%s190 + $0x20] sm:$0xf]
        %v210 = vld [vmem:[%s190 + $0x24] sm:$0xf]
        %v211 = vld [vmem:[%s190 + $0x28] sm:$0xf]
        %v212 = vld [vmem:[%s190 + $0x2c] sm:$0xf]
        %v213 = vld [vmem:[%s190 + $0x30] sm:$0xf]
        %v214 = vld [vmem:[%s190 + $0x34] sm:$0xf]
        %v215 = vld [vmem:[%s190 + $0x38] sm:$0xf]
        %v216 = vld [vmem:[%s190 + $0x3c] sm:$0xf]
        %v225 = vunpack.c.l.b16 %v193
        %v226 = vunpack.c.l.b16 %v194
        %v227 = vunpack.c.l.b16 %v195
        %v228 = vunpack.c.l.b16 %v196
        %v229 = vunpack.c.l.b16 %v197
        %v230 = vunpack.c.l.b16 %v198
        %v231 = vunpack.c.l.b16 %v199
        %v232 = vunpack.c.l.b16 %v200
        %v233 = vpack.c.b16 %v226, %v225
        %v234 = vpack.c.b16 %v228, %v227
        %v235 = vpack.c.b16 %v230, %v229
        %v236 = vpack.c.b16 %v232, %v231
        %v253 = vunpack.c.l.b16 %v201
        %v254 = vunpack.c.l.b16 %v202
        %v255 = vunpack.c.l.b16 %v203
        %v256 = vunpack.c.l.b16 %v204
        %v257 = vunpack.c.l.b16 %v205
        %v258 = vunpack.c.l.b16 %v206
        %v259 = vunpack.c.l.b16 %v207
        %v260 = vunpack.c.l.b16 %v208
        %v261 = vunpack.c.l.b16 %v209
        %v262 = vunpack.c.l.b16 %v210
        %v263 = vunpack.c.l.b16 %v211
        %v264 = vunpack.c.l.b16 %v212
        %v265 = vunpack.c.l.b16 %v213
        %v266 = vunpack.c.l.b16 %v214
        %v267 = vunpack.c.l.b16 %v215
        %v268 = vunpack.c.l.b16 %v216
        %v269 = vpack.c.b16 %v254, %v253
        %v270 = vpack.c.b16 %v256, %v255
        %v271 = vpack.c.b16 %v258, %v257
        %v272 = vpack.c.b16 %v260, %v259
        %v273 = vpack.c.b16 %v262, %v261
        %v274 = vpack.c.b16 %v264, %v263
        %v275 = vpack.c.b16 %v266, %v265
        %v276 = vpack.c.b16 %v268, %v267
        %vm277 = vcmask 31744
        %v279 = vsel %vm277, %v233, 0
        %v282 = vsel %vm277, %v234, 0
        %v285 = vsel %vm277, %v235, 0
        %v288 = vsel %vm277, %v236, 0
        %v291 = vsel %vm277, %v269, 0
        %v294 = vsel %vm277, %v270, 0
        %v297 = vsel %vm277, %v271, 0
        %v300 = vsel %vm277, %v272, 0
        %v303 = vsel %vm277, %v273, 0
        %v306 = vsel %vm277, %v274, 0
        %v309 = vsel %vm277, %v275, 0
        %v312 = vsel %vm277, %v276, 0
        %314 = vmatprep.subr.bf16.mxu0 0
        %315 = vmatpush1.bf16.xpose.msra.mxu0 %v312
        %316 = vmatprep.subr.bf16.mxu0 0
        %317 = vmatpush1.bf16.xpose.msra.mxu0 %v309
        %318 = vmatprep.subr.bf16.mxu0 0
        %319 = vmatpush1.bf16.xpose.msra.mxu0 %v306
        %320 = vmatprep.subr.bf16.mxu0 0
        %321 = vmatpush1.bf16.xpose.msra.mxu0 %v303
        %322 = vmatprep.subr.bf16.mxu0 0
        %323 = vmatpush1.bf16.xpose.msra.mxu0 %v300
        %324 = vmatprep.subr.bf16.mxu0 0
        %325 = vmatpush1.bf16.xpose.msra.mxu0 %v297
        %326 = vmatprep.subr.bf16.mxu0 0
        %327 = vmatpush1.bf16.xpose.msra.mxu0 %v294
        %328 = vmatprep.subr.bf16.mxu0 0
        %329 = vmatpush1.bf16.xpose.msra.mxu0 %v291
        %330 = vmatprep.subr.bf16.mxu0 0
        %331 = vmatpush2.bf16.xpose.msra.mxu0 0
        %332 = vmatprep.subr.bf16.mxu0 0
        %333 = vmatpush2.bf16.xpose.msra.mxu0 0
        %334 = vmatprep.subr.bf16.mxu0 0
        %335 = vmatpush2.bf16.xpose.msra.mxu0 0
        %336 = vmatprep.subr.bf16.mxu0 0
        %337 = vmatpush2.bf16.xpose.msra.mxu0 0
        %338 = vmatprep.subr.bf16.mxu0 0
        %339 = vmatpush2.bf16.xpose.msra.mxu0 0
        %340 = vmatprep.subr.bf16.mxu0 0
        %341 = vmatpush2.bf16.xpose.msra.mxu0 0
        %342 = vmatprep.subr.bf16.mxu0 0
        %343 = vmatpush2.bf16.xpose.msra.mxu0 0
        %344 = vmatprep.subr.bf16.mxu0 0
        %345 = vmatpush2.bf16.xpose.msra.mxu0 0
        %346 = vmatprep.mubr.bf16.mxu0 0
        %347 = vmatmul.mubr.bf16.gmra.mxu0 %v279
        %v348 = vpop.f32.mrf.mxu0
        %v349 = vadd.f32 0.0, %v348
        %v350 = vpop.f32.mrf.mxu0
        %v351 = vpop.f32.mrf.mxu0
        %v352 = vadd.f32 0.0, %v351
        %v353 = vpop.f32.mrf.mxu0
        %354 = vmatprep.mubr.bf16.mxu0 0
        %355 = vmatmul.mubr.bf16.gmra.mxu0 %v282
        %v356 = vpop.f32.mrf.mxu0
        %v357 = vadd.f32 0.0, %v356
        %v358 = vpop.f32.mrf.mxu0
        %v359 = vpop.f32.mrf.mxu0
        %v360 = vadd.f32 0.0, %v359
        %v361 = vpop.f32.mrf.mxu0
        %362 = vmatprep.mubr.bf16.mxu0 0
        %363 = vmatmul.mubr.bf16.gmra.mxu0 %v285
        %v364 = vpop.f32.mrf.mxu0
        %v365 = vadd.f32 0.0, %v364
        %v366 = vpop.f32.mrf.mxu0
        %v367 = vpop.f32.mrf.mxu0
        %v368 = vadd.f32 0.0, %v367
        %v369 = vpop.f32.mrf.mxu0
        %370 = vmatprep.mubr.bf16.mxu0 0
        %371 = vmatmul.mubr.bf16.gmra.mxu0 %v288
        %v372 = vpop.f32.mrf.mxu0
        %v373 = vadd.f32 0.0, %v372
        %v374 = vpop.f32.mrf.mxu0
        %v375 = vpop.f32.mrf.mxu0
        %v376 = vadd.f32 0.0, %v375
        %v377 = vpop.f32.mrf.mxu0
        %378 = vdwg.mxu0
        %v379 = vmax.f32 %v349, %v365
        %v380 = vmax.f32 %v352, %v368
        %v381 = vmax.f32 %v357, %v373
        %v382 = vmax.f32 %v360, %v376
        %v383 = vmax.f32 %v379, %v380
        %v384 = vmax.f32 %v381, %v382
        %v385 = vmax.f32 %v383, %v384
        %v386 = vrot.slane %v385, 4
        %v387 = vmax.f32 %v385, %v386
        %v388 = vrot.slane %v387, 2
        %v389 = vmax.f32 %v387, %v388
        %v390 = vrot.slane %v389, 1
        %v391 = vmax.f32 %v389, %v390
        %v392 = vsub.f32 %v349, %v391
        %v393 = vsub.f32 %v352, %v391
        %v394 = vsub.f32 %v357, %v391
        %v395 = vsub.f32 %v360, %v391
        %v396 = vsub.f32 %v365, %v391
        %v397 = vsub.f32 %v368, %v391
        %v398 = vsub.f32 %v373, %v391
        %v399 = vsub.f32 %v376, %v391
        %v400 = vpack.c.bf16 %v393, %v392
        %v401 = vpack.c.bf16 %v395, %v394
        %v402 = vpack.c.bf16 %v397, %v396
        %v403 = vpack.c.bf16 %v399, %v398
        %v405 = vmul.bf16 %v400, 1069105081
        %v406 = vpow.bf16.pop %v405
        %v408 = vmul.bf16 %v401, 1069105081
        %v409 = vpow.bf16.pop %v408
        %v411 = vmul.bf16 %v402, 1069105081
        %v412 = vpow.bf16.pop %v411
        %v414 = vmul.bf16 %v403, 1069105081
        %v415 = vpow.bf16.pop %v414
        %v416 = vunpack.c.l.bf16 %v406
        %v417 = vunpack.c.h.bf16 %v406
        %v418 = vunpack.c.l.bf16 %v409
        %v419 = vunpack.c.h.bf16 %v409
        %v420 = vunpack.c.l.bf16 %v412
        %v421 = vunpack.c.h.bf16 %v412
        %v422 = vunpack.c.l.bf16 %v415
        %v423 = vunpack.c.h.bf16 %v415
        %v424 = vadd.f32 %v416, %v417
        %v425 = vadd.f32 %v424, %v418
        %v426 = vadd.f32 %v425, %v419
        %v427 = vadd.f32 %v426, %v420
        %v428 = vadd.f32 %v427, %v421
        %v429 = vadd.f32 %v428, %v422
        %v430 = vadd.f32 %v429, %v423
        %v431 = vrot.slane %v430, 4
        %v432 = vadd.f32 %v430, %v431
        %v433 = vrot.slane %v432, 2
        %v434 = vadd.f32 %v432, %v433
        %v435 = vrot.slane %v434, 1
        %v436 = vadd.f32 %v434, %v435
        %v437 = vrcp.pop %v436
        %v438 = vmul.f32 %v416, %v437
        %v439 = vmul.f32 %v417, %v437
        %v440 = vmul.f32 %v418, %v437
        %v441 = vmul.f32 %v419, %v437
        %v442 = vmul.f32 %v420, %v437
        %v443 = vmul.f32 %v421, %v437
        %v444 = vmul.f32 %v422, %v437
        %v445 = vmul.f32 %v423, %v437
        %v446 = vpack.c.bf16 %v439, %v438
        %v447 = vpack.c.bf16 %v441, %v440
        %v448 = vpack.c.bf16 %v443, %v442
        %v449 = vpack.c.bf16 %v445, %v444
        %v454 = vunpack.c.l.b16 %v446
        %v455 = vunpack.c.h.b16 %v446
        %v456 = vunpack.c.l.b16 %v447
        %v457 = vunpack.c.h.b16 %v447
        %v458 = vunpack.c.l.b16 %v448
        %v459 = vunpack.c.h.b16 %v448
        %v460 = vunpack.c.l.b16 %v449
        %v461 = vunpack.c.h.b16 %v449
        %v462 = vpack.c.b16 %v454, %v454
        %v463 = vpack.c.b16 %v455, %v455
        %v464 = vpack.c.b16 %v456, %v456
        %v465 = vpack.c.b16 %v457, %v457
        %v466 = vpack.c.b16 %v458, %v458
        %v467 = vpack.c.b16 %v459, %v459
        %v468 = vpack.c.b16 %v460, %v460
        %v469 = vpack.c.b16 %v461, %v461
        %478 = vst [vmem:[%s176] sm:$0xf] %v462
        %479 = vst [vmem:[%s176 + $0x4] sm:$0xf] %v463
        %480 = vst [vmem:[%s176 + $0x8] sm:$0xf] %v464
        %481 = vst [vmem:[%s176 + $0xc] sm:$0xf] %v465
        %482 = vst [vmem:[%s176 + $0x10] sm:$0xf] %v466
        %483 = vst [vmem:[%s176 + $0x14] sm:$0xf] %v467
        %484 = vst [vmem:[%s176 + $0x18] sm:$0xf] %v468
        %485 = vst [vmem:[%s176 + $0x1c] sm:$0xf] %v469
        %s486 = sand.u32 %s92, 1
        %s487 = scalar_lea.sflag [#allocation3], %s486
        %s488 = sand.u32 %s92, 1
        %s489 = smul.addr %s488, 32
        %s490 = scalar_lea.vmem [#allocation2], %s489
        // Predicated region
        $region29: #{tpu_custom_call.1} parent=27 // pred_check
          %p491 = pneg %p102
        $region30: #{tpu_custom_call.1} parent=27 // pred_check_branch
          %493 = sbr.rel (%p491) target = $region32
        $region31: #{tpu_custom_call.1} parent=27 // pred_region
          %s495 = ssub.s32 512, 512
          %496 = vsyncadd %s487, %s495
          %s497 = smul.addr %s20, 8
          %s498 = sadd.s32 %s21, %s497
          %s499 = smul.addr %s498, 64
          %s500 = scalar_lea.hbm %s2, %s499
          %s501 = sshll.u32 %s490, 4
          %s502 = int_to_ptr.vmem [resolvable:$true] %s501
          %507 = dma.vmem_to_hbm [thread:$0]  %s502, 512, %s500, %s487, 64, 64, 4
        $region32: #{tpu_custom_call.1} parent=27 // pred_fallthru
          _
      $region28: #{tpu_custom_call.1} parent=5 // pred_fallthru
        _
      %p508 = scmp.le.s32.totalorder 2, %s11
      // Predicated region
      $region33: #{tpu_custom_call.1} parent=5 // pred_check
        %p509 = pneg %p508
      $region34: #{tpu_custom_call.1} parent=5 // pred_check_branch
        %511 = sbr.rel (%p509) target = $region36
      $region35: #{tpu_custom_call.1} parent=5 // pred_region
        %s512 = ssub.s32 %s11, 2
        // Predicated region
        $region37: #{tpu_custom_call.1} parent=35 // pred_check
          %p513 = pneg %p108
        $region38: #{tpu_custom_call.1} parent=35 // pred_check_branch
          %515 = sbr.rel (%p513) target = $region40
        $region39: #{tpu_custom_call.1} parent=35 // pred_region
          %s516 = sand.u32 %s93, 1
          %s517 = scalar_lea.sflag [#allocation3], %s516
          %s518 = sand.u32 %s93, 1
          %s519 = smul.addr %s518, 32
          %s520 = scalar_lea.vmem [#allocation2], %s519
          %521 = dma.done %s517, 512
        $region40: #{tpu_custom_call.1} parent=35 // pred_fallthru
          _
      $region36: #{tpu_custom_call.1} parent=5 // pred_fallthru
        _
    $region6: #{tpu_custom_call.1} parent=1 // loop_footer
      %s15 = sadd.s32 1, %s11
    $region7: #{tpu_custom_call.1} parent=1 // loop_footer_branch
      %10 = sbr.rel target = $region3
    $region8: #{tpu_custom_call.1} parent=1 // loop_exit
      _
    %522 = vsyncpa [#allocation3], 1
    %s523 = scalar_lea.sflag [#allocation3], 1
    %524 = vsyncpa %s523, 1

</llo_original>
